<compile_context>
chip_gen: v5e
topology: v5e:2x2
jax: 0.10.0
libtpu: 0.0.40
codegen_flags: <defaults>
</compile_context>

<pallas_src>
import functools
import math

import jax
import jax.numpy as jnp
from jax.experimental import pallas as pl
from jax.experimental.pallas import tpu as pltpu

_VMEM_LIMIT_BYTES = 32 * 1024 * 1024     # safe scoped-VMEM budget on v5e/v6e/v7x
_TINY_BYTES_THRESHOLD = 256 * 1024       # below this, plain XLA add wins
_BUFFERED3_MIN_BYTES = 4 * 1024 * 1024   # enable 3-deep pipelining above this block size


def _chip_params():
    """(target x-block bytes, #TensorCores to split the S axis over).

    v7x streams ~3.2 TB/s so a 2 MiB block takes <1 us and the ~0.35 us
    per-grid-step overhead bites -> use ~4 MiB blocks and keep >=1 grid step
    per TC so both cores engage.  v5e/v6e (1 TC, 0.8-1.4 TB/s) are already at
    HBM roofline with 2 MiB blocks.
    """
    kind = ""
    try:
        kind = jax.devices()[0].device_kind.lower()
    except Exception:
        pass
    if "v7" in kind:
        return 4 * 1024 * 1024, 2
    return 2 * 1024 * 1024, 1


def _choose_ts(S, row_bytes, sublane, target_block_bytes, num_cores):
    """Sequence-tile size: VMEM-budgeted, sublane-aligned, >=num_cores grid steps."""
    ts = max(1, min(S, target_block_bytes // max(row_bytes, 1)))
    if num_cores > 1:
        per_core = pl.cdiv(S, num_cores)
        if per_core >= sublane:          # only split if each core still gets a full tile
            ts = min(ts, per_core)
    if ts >= S:
        return S                         # full-extent block: (8,128) rule satisfied
    return min(max(sublane, (ts // sublane) * sublane), S)


def _mk_spec(shape, index_map, buffered):
    if buffered is not None:
        return pl.BlockSpec(shape, index_map, pipeline_mode=buffered)
    return pl.BlockSpec(shape, index_map)


def _pe_add_flat_kernel(x_ref, pe_ref, o_ref, *, batch):
    # x_ref/o_ref: (ts, B*D); pe_ref: (ts, D).  Replicate pe across batch in
    # VMEM (lane-aligned concat since D % 128 == 0 on this path) instead of
    # pre-tiling it in HBM, which would double the kernel's HBM traffic.
    pe = pe_ref[...]
    if batch > 1:
        pe = jnp.concatenate([pe] * batch, axis=-1)
    o_ref[...] = x_ref[...] + pe


def _pe_add_3d_kernel(x_ref, pe_ref, o_ref):
    # x_ref/o_ref: (ts, B, D); pe_ref: (ts, 1, D) sublane-broadcasts over batch in VMEM.
    o_ref[...] = x_ref[...] + pe_ref[...]


def make_positional_encoding_table(d_model: int, max_len: int = 50,
                                   dtype=jnp.float32) -> jnp.ndarray:
    """Deterministic buffer identical to the PyTorch __init__ (plain JAX glue).

    Built directly in the model dtype so no per-call cast is needed.
    """
    position = jnp.arange(0, max_len, dtype=jnp.float32)[:, None]              # (max_len, 1)
    div_term = jnp.exp(
        jnp.arange(0, d_model, 2, dtype=jnp.float32) * (-math.log(10000.0) / d_model)
    )                                                                           # (ceil(D/2),)
    angles = position * div_term                                                # (max_len, ceil(D/2))
    pe = jnp.zeros((max_len, d_model), dtype=jnp.float32)
    pe = pe.at[:, 0::2].set(jnp.sin(angles))
    pe = pe.at[:, 1::2].set(jnp.cos(angles)[:, : d_model // 2])  # robust to odd d_model
    # unsqueeze(0).transpose(0, 1) -> (max_len, 1, d_model)
    return pe[:, None, :].astype(dtype)


def positional_encoding_forward(
    x: jnp.ndarray, pe: jnp.ndarray, *, force_pallas: bool = False,
    alias_input: bool = True,
) -> jnp.ndarray:
    """x: (S, B, D); pe: (max_len, 1, D). Returns x + pe[:S] (broadcast over batch)."""
    S, B, D = x.shape
    if S > pe.shape[0]:
        raise ValueError(f"seq_len {S} exceeds positional-encoding max_len {pe.shape[0]}")

    pe_s = pe[:S]                                   # (S, 1, D)
    if pe_s.dtype != x.dtype:
        # Build the table with dtype=x.dtype to hoist this cast out of the call.
        pe_s = pe_s.astype(x.dtype)
    itemsize = jnp.dtype(x.dtype).itemsize

    # Tiny inputs: pallas launch + per-step overhead dominates; let XLA fuse it.
    if not force_pallas and x.size * itemsize < _TINY_BYTES_THRESHOLD:
        return x + pe_s

    target_block_bytes, num_cores = _chip_params()
    sublane = max(8, 32 // itemsize)                # 8 f32 / 16 bf16 / 32 int8,fp8

    compiler_params = pltpu.CompilerParams(
        dimension_semantics=("parallel",),          # shard tiled S axis across TCs (v7x)
        vmem_limit_bytes=_VMEM_LIMIT_BYTES,
    )
    cost = pl.CostEstimate(
        flops=S * B * D,
        transcendentals=0,
        bytes_accessed=(2 * S * B * D + S * D) * itemsize,
    )
    io_alias = {0: 0} if alias_input else {}

    if D % 128 == 0:
        # Flattened lane-dense path: x/out as (S, B*D) slabs (dense vst, full
        # sublane occupancy even for small B), pe as a (ts, D) block replicated
        # across batch inside the kernel.
        C = B * D
        x2 = x.reshape(S, C)
        pe2 = pe_s.reshape(S, D)
        ts = _choose_ts(S, C * itemsize, sublane, target_block_bytes, num_cores)
        buffered = pl.Buffered(3) if ts * C * itemsize >= _BUFFERED3_MIN_BYTES else None
        out2 = pl.pallas_call(
            functools.partial(_pe_add_flat_kernel, batch=B),
            out_shape=jax.ShapeDtypeStruct((S, C), x.dtype),
            grid_spec=pltpu.PrefetchScalarGridSpec(
                num_scalar_prefetch=0,
                grid=(pl.cdiv(S, ts),),
                in_specs=[
                    _mk_spec((ts, C), lambda i: (i, 0), buffered),
                    pl.BlockSpec((ts, D), lambda i: (i, 0)),
                ],
                out_specs=_mk_spec((ts, C), lambda i: (i, 0), buffered),
            ),
            compiler_params=compiler_params,
            cost_estimate=cost,
            input_output_aliases=io_alias,
        )(x2, pe2)
        return out2.reshape(S, B, D)

    # D % 128 != 0: keep 3D blocks; pe block is (ts, 1, D) and sublane-broadcasts
    # over batch in VMEM (no x-sized pe duplication in HBM).  The (B, D) minor
    # dims equal the full array dims, so the (8, 128) rule is satisfied.
    ts = _choose_ts(S, B * D * itemsize, sublane, target_block_bytes, num_cores)
    buffered = pl.Buffered(3) if ts * B * D * itemsize >= _BUFFERED3_MIN_BYTES else None
    return pl.pallas_call(
        _pe_add_3d_kernel,
        out_shape=jax.ShapeDtypeStruct((S, B, D), x.dtype),
        grid_spec=pltpu.PrefetchScalarGridSpec(
            num_scalar_prefetch=0,
            grid=(pl.cdiv(S, ts),),
            in_specs=[
                _mk_spec((ts, B, D), lambda i: (i, 0, 0), buffered),
                pl.BlockSpec((ts, 1, D), lambda i: (i, 0, 0)),
            ],
            out_specs=_mk_spec((ts, B, D), lambda i: (i, 0, 0), buffered),
        ),
        compiler_params=compiler_params,
        cost_estimate=cost,
        input_output_aliases=io_alias,
    )(x, pe_s)


if __name__ == "__main__":
    key = jax.random.PRNGKey(0)
    k1, k2 = jax.random.split(key)

    # Case 1: module-default small shape (d_model=32) -> 3D sublane-broadcast path.
    # force_pallas=True so the kernel actually runs despite the tiny-input fallback.
    d_model, max_len, seq_len, batch = 32, 50, 8, 2
    x = jax.random.normal(k1, (seq_len, batch, d_model), dtype=jnp.float32)
    pe = make_positional_encoding_table(d_model, max_len, dtype=x.dtype)
    ref = x + pe[:seq_len]                           # reference BEFORE the (aliased) call
    out = jax.block_until_ready(positional_encoding_forward(x, pe, force_pallas=True))
    assert out.shape == (seq_len, batch, d_model)
    assert jnp.allclose(out, ref, atol=1e-6), "mismatch vs reference (3D path)"

    # Case 2: lane-dense d_model (multiple of 128) -> flattened (S, B*D) path with
    # in-kernel pe replication across batch.
    d_model2, seq_len2, batch2 = 128, 16, 2
    x2 = jax.random.normal(k2, (seq_len2, batch2, d_model2), dtype=jnp.float32)
    pe2 = make_positional_encoding_table(d_model2, max_len, dtype=x2.dtype)
    ref2 = x2 + pe2[:seq_len2]
    out2 = jax.block_until_ready(positional_encoding_forward(x2, pe2, force_pallas=True))
    assert out2.shape == (seq_len2, batch2, d_model2)
    assert jnp.allclose(out2, ref2, atol=1e-6), "mismatch vs reference (flat path)"

    print("KERNEL_OK")
</pallas_src>

<mosaic_0001>
module attributes {stable_mosaic.version = 11 : i64} {
  func.func @_pe_add_3d_kernel(%arg0: i32, %arg1: memref<8x2x32xf32, #tpu.memory_space<vmem>>, %arg2: memref<8x1x32xf32, #tpu.memory_space<vmem>>, %arg3: memref<8x2x32xf32, #tpu.memory_space<vmem>>) attributes {dimension_semantics = [#tpu.dimension_semantics<parallel>], iteration_bounds = array<i64: 1>, scalar_prefetch = 0 : i64, scratch_operands = 0 : i64, tpu.core_type = #tpu.core_type<tc>, window_params = [{transform_indices = @transform_0, window_bounds = array<i64: 8, 2, 32>}, {transform_indices = @transform_1, window_bounds = array<i64: 8, 1, 32>}, {transform_indices = @transform_2, window_bounds = array<i64: 8, 2, 32>}]} {
    %c0 = arith.constant 0 : index
    %c0_0 = arith.constant 0 : index
    %c0_1 = arith.constant 0 : index
    %0 = vector.load %arg1[%c0, %c0_0, %c0_1] : memref<8x2x32xf32, #tpu.memory_space<vmem>>, vector<8x2x32xf32>
    %c0_2 = arith.constant 0 : index
    %c0_3 = arith.constant 0 : index
    %c0_4 = arith.constant 0 : index
    %1 = vector.load %arg2[%c0_2, %c0_3, %c0_4] : memref<8x1x32xf32, #tpu.memory_space<vmem>>, vector<8x1x32xf32>
    %2 = vector.broadcast %1 : vector<8x1x32xf32> to vector<8x2x32xf32>
    %3 = arith.addf %0, %2 : vector<8x2x32xf32>
    %c0_5 = arith.constant 0 : index
    %c0_6 = arith.constant 0 : index
    %c0_7 = arith.constant 0 : index
    %4 = vector.load %arg3[%c0_5, %c0_6, %c0_7] : memref<8x2x32xf32, #tpu.memory_space<vmem>>, vector<8x2x32xf32>
    tpu.vector_store %arg3[%c0_5, %c0_6, %c0_7], %3 {strides = array<i32>} : memref<8x2x32xf32, #tpu.memory_space<vmem>>, vector<8x2x32xf32>,
    return
  }
  func.func @transform_0(%arg0: i32) -> (i32, i32, i32) {
    %c0_i32 = arith.constant 0 : i32
    %c0_i32_0 = arith.constant 0 : i32
    %c0_i32_1 = arith.constant 0 : i32
    return %arg0, %c0_i32, %c0_i32_0 : i32, i32, i32
  }
  func.func @transform_1(%arg0: i32) -> (i32, i32, i32) {
    %c0_i32 = arith.constant 0 : i32
    %c0_i32_0 = arith.constant 0 : i32
    %c0_i32_1 = arith.constant 0 : i32
    return %arg0, %c0_i32, %c0_i32_0 : i32, i32, i32
  }
  func.func @transform_2(%arg0: i32) -> (i32, i32, i32) {
    %c0_i32 = arith.constant 0 : i32
    %c0_i32_0 = arith.constant 0 : i32
    %c0_i32_1 = arith.constant 0 : i32
    return %arg0, %c0_i32, %c0_i32_0 : i32, i32, i32
  }
}

</mosaic_0001>

<llo_original>
// kernel: tpu_custom_call.1
$region0: #{tpu_custom_call.1}
  #allocation0 [shape = 'u32[]', space=smem, size = 0x4, offset = 0x4, fixed_abs, tag = 'smem constant byte address 0x4 - core index']
  #allocation1 [shape = 'u32[72,128]{1,0:T(1,128)}', space=vmem, size = 0x9000, scoped, tag = 'internal scratch']
  %s0 = inlined_call_operand.hbm [shape: f32[8,2,32], index: 0, kind: input, shape index: {}, may-alias: {0,2}]
  %s1 = inlined_call_operand.vmem [shape: f32[8,1,32], index: 1, kind: input, shape index: {}]
  %s2 = inlined_call_operand.hbm [shape: f32[8,2,32], index: 2, kind: output, shape index: {}, may-alias: {0,2}]
  %s3 = sld [smem:[#allocation0]]
  $region22: #{tpu_custom_call.1} parent=0
    _
  %s5 = ssub.s32 1, %s3
  %s6 = scalar_select 0, %s5, %s3
  $region1: #{tpu_custom_call.1} parent=0
    #allocation2 [shape = 'u8[8192]{0}', space=vmem, size = 0x2000, scoped, tag = 'input window, operand 0, single buffered']
    #allocation3 [shape = 's32[1]{0}', space=sflag, size = 0x4, scoped, tag = 'scoped memory for tpu_custom_call.1']
    #allocation4 [shape = 's32[1]{0}', space=sflag, size = 0x4, scoped, tag = 'scoped memory for tpu_custom_call.1']
    #allocation5 [shape = 'u8[8192]{0}', space=vmem, size = 0x2000, scoped, tag = 'output window, operand 0, single buffered']
    %7 = vsyncpa [#allocation3], 0
    %8 = vsyncpa [#allocation4], 0
    // Predicated region
    $region2: #{tpu_custom_call.1} parent=1 // pred_check
      _
    $region3: #{tpu_custom_call.1} parent=1 // pred_check_branch
      %10 = sbr.rel (0) target = $region5
    $region4: #{tpu_custom_call.1} parent=1 // pred_region
      %12 = vsyncadd [#allocation3], 0
      %s13 = sshll.u32 %s0, 4
      %s14 = int_to_ptr.hbm [resolvable:$true] %s13
      %s15 = sshll.u32 [#allocation2], 4
      %s16 = int_to_ptr.vmem [resolvable:$true] %s15
      %21 = dma.hbm_to_vmem [thread:$0]  %s14, 256, %s16, [#allocation3], 32, 32, 2
    $region5: #{tpu_custom_call.1} parent=1 // pred_fallthru
      _
    // Predicated region
    $region6: #{tpu_custom_call.1} parent=1 // pred_check
      _
    $region7: #{tpu_custom_call.1} parent=1 // pred_check_branch
      %23 = sbr.rel (0) target = $region9
    $region8: #{tpu_custom_call.1} parent=1 // pred_region
      _
    $region9: #{tpu_custom_call.1} parent=1 // pred_fallthru
      _
    // Predicated region
    $region10: #{tpu_custom_call.1} parent=1 // pred_check
      _
    $region11: #{tpu_custom_call.1} parent=1 // pred_check_branch
      %25 = sbr.rel (0) target = $region13
    $region12: #{tpu_custom_call.1} parent=1 // pred_region
      %27 = dma.done [#allocation3], 256
    $region13: #{tpu_custom_call.1} parent=1 // pred_fallthru
      _
    %v28 = vld [vmem:[#allocation2] sm:$0x3]
    %v29 = vld [vmem:[#allocation2 + $0x2] sm:$0x3]
    %v30 = vld [vmem:[#allocation2 + $0x4] sm:$0x3]
    %v31 = vld [vmem:[#allocation2 + $0x6] sm:$0x3]
    %v32 = vld [vmem:[#allocation2 + $0x8] sm:$0x3]
    %v33 = vld [vmem:[#allocation2 + $0xa] sm:$0x3]
    %v34 = vld [vmem:[#allocation2 + $0xc] sm:$0x3]
    %v35 = vld [vmem:[#allocation2 + $0xe] sm:$0x3]
    %v36 = vld [vmem:[%s1] sm:$0x1]
    %v37 = vld [vmem:[%s1 + $0x1] sm:$0x1]
    %v38 = vld [vmem:[%s1 + $0x2] sm:$0x1]
    %v39 = vld [vmem:[%s1 + $0x3] sm:$0x1]
    %v40 = vld [vmem:[%s1 + $0x4] sm:$0x1]
    %v41 = vld [vmem:[%s1 + $0x5] sm:$0x1]
    %v42 = vld [vmem:[%s1 + $0x6] sm:$0x1]
    %v43 = vld [vmem:[%s1 + $0x7] sm:$0x1]
    %v52 = vperm.slane %v36, 0
    %v53 = vperm.slane %v37, 0
    %v54 = vperm.slane %v38, 0
    %v55 = vperm.slane %v39, 0
    %v56 = vperm.slane %v40, 0
    %v57 = vperm.slane %v41, 0
    %v58 = vperm.slane %v42, 0
    %v59 = vperm.slane %v43, 0
    %v68 = vadd.f32 %v28, %v52
    %v69 = vadd.f32 %v29, %v53
    %v70 = vadd.f32 %v30, %v54
    %v71 = vadd.f32 %v31, %v55
    %v72 = vadd.f32 %v32, %v56
    %v73 = vadd.f32 %v33, %v57
    %v74 = vadd.f32 %v34, %v58
    %v75 = vadd.f32 %v35, %v59
    %vm76 = vcmask 254976
    %77 = vst.msk [vmem:[#allocation5] sm:$0x3] %vm76, %v68
    %78 = vst.msk [vmem:[#allocation5 + $0x2] sm:$0x3] %vm76, %v69
    %79 = vst.msk [vmem:[#allocation5 + $0x4] sm:$0x3] %vm76, %v70
    %80 = vst.msk [vmem:[#allocation5 + $0x6] sm:$0x3] %vm76, %v71
    %81 = vst.msk [vmem:[#allocation5 + $0x8] sm:$0x3] %vm76, %v72
    %82 = vst.msk [vmem:[#allocation5 + $0xa] sm:$0x3] %vm76, %v73
    %83 = vst.msk [vmem:[#allocation5 + $0xc] sm:$0x3] %vm76, %v74
    %84 = vst.msk [vmem:[#allocation5 + $0xe] sm:$0x3] %vm76, %v75
    // Predicated region
    $region14: #{tpu_custom_call.1} parent=1 // pred_check
      _
    $region15: #{tpu_custom_call.1} parent=1 // pred_check_branch
      %86 = sbr.rel (0) target = $region17
    $region16: #{tpu_custom_call.1} parent=1 // pred_region
      %88 = vsyncadd [#allocation4], 0
      %s89 = sshll.u32 [#allocation5], 4
      %s90 = int_to_ptr.vmem [resolvable:$true] %s89
      %s91 = sshll.u32 %s2, 4
      %s92 = int_to_ptr.hbm [resolvable:$true] %s91
      %97 = dma.vmem_to_hbm [thread:$0]  %s90, 256, %s92, [#allocation4], 32, 32, 2
    $region17: #{tpu_custom_call.1} parent=1 // pred_fallthru
      _
    // Predicated region
    $region18: #{tpu_custom_call.1} parent=1 // pred_check
      _
    $region19: #{tpu_custom_call.1} parent=1 // pred_check_branch
      %99 = sbr.rel (0) target = $region21
    $region20: #{tpu_custom_call.1} parent=1 // pred_region
      %101 = dma.done [#allocation4], 256
    $region21: #{tpu_custom_call.1} parent=1 // pred_fallthru
      _
    %102 = vsyncpa [#allocation3], 1
    %103 = vsyncpa [#allocation4], 1

</llo_original>
